<compile_context>
chip_gen: v6e
topology: v6e:2x2x1
jax: 0.10.0
libtpu: 0.0.40
codegen_flags: <defaults>
</compile_context>

<pallas_src>
import functools

import jax
import jax.numpy as jnp
from jax.experimental import pallas as pl
from jax.experimental.pallas import tpu as pltpu


def _conv_bn_relu_kernel(p_ref, w_ref, scale_ref, bias_ref, o_ref, *, tk, n_k):
    # p_ref:     (TM, TK)  bf16 im2col patch tile
    # w_ref:     (Kp, TN)  bf16 flattened conv weight (VMEM-resident, full K)
    # scale_ref: (1,  TN)  f32 BN scale   (gamma / sqrt(var + eps))
    # bias_ref:  (1,  TN)  f32 BN bias    (beta - mean * scale)
    # o_ref:     (TM, TN)  f32 output tile (also the accumulator; resident
    #                      across the K grid axis)
    if n_k == 1:
        acc = jnp.dot(p_ref[...], w_ref[...], preferred_element_type=jnp.float32)
        y = acc * scale_ref[...] + bias_ref[...]
        o_ref[...] = jnp.maximum(y, 0.0).astype(o_ref.dtype)  # ReLU
    else:
        kk = pl.program_id(2)
        off = pl.multiple_of(kk * tk, tk)
        part = jnp.dot(p_ref[...], w_ref[pl.ds(off, tk), :],
                       preferred_element_type=jnp.float32)

        @pl.when(kk == 0)
        def _init():
            o_ref[...] = part

        @pl.when(kk > 0)
        def _accum():
            o_ref[...] += part

        @pl.when(kk == n_k - 1)
        def _finalize():
            y = o_ref[...] * scale_ref[...] + bias_ref[...]
            o_ref[...] = jnp.maximum(y, 0.0).astype(o_ref.dtype)  # ReLU


def _im2col_nhwc(x_nhwc, k, p, s, d):
    """(N, H, W, C1) -> patches (N*Hout*Wout, k*k*C1), K order = (kh, kw, c)."""
    N, H, W, C1 = x_nhwc.shape
    Hout = (H + 2 * p - d * (k - 1) - 1) // s + 1
    Wout = (W + 2 * p - d * (k - 1) - 1) // s + 1
    xp = jnp.pad(x_nhwc, ((0, 0), (p, p), (p, p), (0, 0)))
    cols = []
    for i in range(k):
        for j in range(k):
            hi, wj = i * d, j * d
            cols.append(xp[:, hi:hi + s * (Hout - 1) + 1:s,
                           wj:wj + s * (Wout - 1) + 1:s, :])  # (N, Hout, Wout, C1)
    patches = jnp.concatenate(cols, axis=-1)  # (N, Hout, Wout, k*k*C1)
    return patches.reshape(N * Hout * Wout, k * k * C1), Hout, Wout


def _round_up(x, m):
    return (x + m - 1) // m * m


@functools.lru_cache(maxsize=1)
def _tpu_params():
    """Best-effort (vmem_capacity_bytes, num_tensorcores)."""
    cap = 64 * 1024 * 1024   # safe for v5e/v6e/v7x
    num_tc = 1
    try:
        info = pltpu.get_tpu_info()
        c = getattr(info, "vmem_capacity_bytes", None)
        if c:
            cap = int(c)
        for name in ("num_cores", "core_count", "tensorcore_count",
                     "num_tensorcores"):
            v = getattr(info, name, None)
            if v:
                num_tc = int(v)
                break
    except Exception:
        pass
    return cap, num_tc


def _vmem_bytes(tm, tn, tk, kp):
    patches = 2 * tm * tk * 2     # bf16, double-buffered
    weight = 2 * kp * tn * 2      # bf16, resident full-K block (2 buffers)
    out = 2 * tm * tn * 4         # f32 output block (2 buffers)
    vecs = 2 * 2 * tn * 4         # scale + bias
    return patches + weight + out + vecs


@functools.partial(jax.jit,
                   static_argnames=("k", "p", "s", "d", "channels_last"))
def conv_forward(x, weight, bn_gamma, bn_beta, bn_mean, bn_var, *,
                 k, p, s, d, channels_last=False):
    """Equivalent of Conv(c1, c2, k, p, s, d, g=1, act_type='relu').forward(x).

    x:      (N, C1, H, W)  NCHW, float32
    weight: (C2, C1, k, k) PyTorch Conv2d weight layout
    returns (N, C2, Hout, Wout) float32 (or NHWC if channels_last=True)
    """
    N, C1, H, W = x.shape
    C2 = weight.shape[0]
    eps = 1e-5

    # im2col on bf16 NHWC input (MXU-friendly; halves patch-matrix HBM traffic;
    # note: conv therefore computes in bf16 precision with f32 accumulation).
    x_nhwc = jnp.transpose(x, (0, 2, 3, 1)).astype(jnp.bfloat16)
    patches, Hout, Wout = _im2col_nhwc(x_nhwc, k, p, s, d)
    M, K = patches.shape

    # --- hardware-aware tile / padding selection (static Python ints) -------
    cap, num_tc = _tpu_params()
    vmem_limit = min(int(cap * 0.85), 100 * 1024 * 1024)
    budget = int(vmem_limit * 0.8)

    # Lane-dense output channels; 256-multiple for the 256-wide v6e/v7x MXU.
    C2p = 128 if C2 <= 128 else _round_up(C2, 256)

    # Keep the whole reduction in one step when K is modest (weight-stationary,
    # no init/finalize); otherwise tile K and slice the resident weight.
    if K <= 2048:
        Kp = _round_up(K, 128)
        TK = Kp
    else:
        TK = 2048
        Kp = _round_up(K, TK)

    # Output-channel tile: full C2p unless the resident weight would be huge.
    if C2p <= 512 or 2 * Kp * C2p * 2 <= budget // 3:
        TN = C2p
    else:
        TN = 512
        C2p = _round_up(C2, TN)

    # M tile: as big as VMEM allows; only force an M split on multi-TC parts.
    Mp128 = _round_up(M, 128)
    tm_max = min(1024, Mp128)
    if num_tc > 1 and Mp128 >= 128 * num_tc:
        tm_max = min(tm_max, _round_up(-(-Mp128 // num_tc), 128))
    TM = tm_max
    while TM > 128 and _vmem_bytes(TM, TN, TK, Kp) > budget:
        TM -= 128
    TM = max(TM, 128)
    Mp = _round_up(M, TM)
    n_k = Kp // TK

    # --- operand prep --------------------------------------------------------
    # BatchNorm (inference): y = conv * scale + bias, scale/bias stay f32 and
    # are applied in the kernel epilogue (weights stay unscaled bf16).
    scale = (bn_gamma / jnp.sqrt(bn_var + eps)).astype(jnp.float32)   # (C2,)
    bias = (bn_beta - bn_mean * scale).astype(jnp.float32)            # (C2,)

    # Weight flattened in (kh, kw, c1) order to match the im2col K order.
    w_mat = jnp.transpose(weight, (2, 3, 1, 0)).reshape(k * k * C1, C2)
    w_mat = jnp.pad(w_mat, ((0, Kp - K), (0, C2p - C2))).astype(jnp.bfloat16)

    patches = jnp.pad(patches, ((0, Mp - M), (0, Kp - K)))            # bf16
    scale_p = jnp.pad(scale, (0, C2p - C2)).reshape(1, C2p)
    bias_p = jnp.pad(bias, (0, C2p - C2)).reshape(1, C2p)

    grid = (C2p // TN, Mp // TM, n_k)   # j (weight tile) outermost, K last

    kernel = functools.partial(_conv_bn_relu_kernel, tk=TK, n_k=n_k)

    out = pl.pallas_call(
        kernel,
        out_shape=jax.ShapeDtypeStruct((Mp, C2p), jnp.float32),
        grid_spec=pltpu.PrefetchScalarGridSpec(
            num_scalar_prefetch=0,
            grid=grid,
            in_specs=[
                pl.BlockSpec((TM, TK), lambda j, i, kk: (i, kk)),   # patches
                pl.BlockSpec((Kp, TN), lambda j, i, kk: (0, j)),    # weight (resident)
                pl.BlockSpec((1, TN), lambda j, i, kk: (0, j)),     # BN scale
                pl.BlockSpec((1, TN), lambda j, i, kk: (0, j)),     # BN bias
            ],
            out_specs=pl.BlockSpec((TM, TN), lambda j, i, kk: (i, j)),
        ),
        compiler_params=pltpu.CompilerParams(
            dimension_semantics=("parallel", "parallel", "arbitrary"),
            vmem_limit_bytes=vmem_limit,
        ),
    )(patches, w_mat, scale_p, bias_p)

    out = out[:M, :C2].reshape(N, Hout, Wout, C2)
    if channels_last:
        return out
    # NCHW for semantic parity with the PyTorch module (costs one transpose
    # round trip; pass channels_last=True to skip it when the consumer is NHWC).
    return jnp.transpose(out, (0, 3, 1, 2))


if __name__ == "__main__":
    # Module config: Conv(c1=4, c2=8, k=3, p=1, s=1, d=1, g=1, act_type='relu')
    c1, c2, k, p, s, d = 4, 8, 3, 1, 1, 1
    N, H, W = 2, 16, 16

    key = jax.random.PRNGKey(0)
    kx, kw = jax.random.split(key)
    x = jax.random.normal(kx, (N, c1, H, W), dtype=jnp.float32)
    weight = 0.1 * jax.random.normal(kw, (c2, c1, k, k), dtype=jnp.float32)

    # BatchNorm2d default init: gamma=1, beta=0, running_mean=0, running_var=1.
    bn_gamma = jnp.ones((c2,), jnp.float32)
    bn_beta = jnp.zeros((c2,), jnp.float32)
    bn_mean = jnp.zeros((c2,), jnp.float32)
    bn_var = jnp.ones((c2,), jnp.float32)

    y = conv_forward(x, weight, bn_gamma, bn_beta, bn_mean, bn_var,
                     k=k, p=p, s=s, d=d)
    jax.block_until_ready(y)

    # Sanity check against pure-JAX f32 reference (lax conv + BN fold + ReLU).
    # Loose tolerance because the kernel's MXU path uses bf16 inputs.
    ref = jax.lax.conv_general_dilated(
        x, weight, window_strides=(s, s), padding=[(p, p), (p, p)],
        rhs_dilation=(d, d), dimension_numbers=("NCHW", "OIHW", "NCHW"))
    scale = (bn_gamma / jnp.sqrt(bn_var + 1e-5)).reshape(1, c2, 1, 1)
    bias = (bn_beta - bn_mean * bn_gamma / jnp.sqrt(bn_var + 1e-5)).reshape(1, c2, 1, 1)
    ref = jnp.maximum(ref * scale + bias, 0.0)

    assert y.shape == (N, c2, H, W)
    assert jnp.allclose(y, ref, atol=2e-2, rtol=2e-2), (
        f"max abs err = {jnp.max(jnp.abs(y - ref))}")

    print("KERNEL_OK")
</pallas_src>

<mosaic_0001>
module attributes {stable_mosaic.version = 11 : i64} {
  func.func @_conv_bn_relu_kernel(%arg0: i32, %arg1: i32, %arg2: i32, %arg3: memref<512x128xbf16, #tpu.memory_space<vmem>>, %arg4: memref<128x128xbf16, #tpu.memory_space<vmem>>, %arg5: memref<1x128xf32, #tpu.memory_space<vmem>>, %arg6: memref<1x128xf32, #tpu.memory_space<vmem>>, %arg7: memref<512x128xf32, #tpu.memory_space<vmem>>) attributes {dimension_semantics = [#tpu.dimension_semantics<parallel>, #tpu.dimension_semantics<parallel>, #tpu.dimension_semantics<arbitrary>], iteration_bounds = array<i64: 1, 1, 1>, scalar_prefetch = 0 : i64, scratch_operands = 0 : i64, tpu.core_type = #tpu.core_type<tc>, window_params = [{transform_indices = @transform_0, window_bounds = array<i64: 512, 128>}, {transform_indices = @transform_1, window_bounds = array<i64: 128, 128>}, {transform_indices = @transform_2, window_bounds = array<i64: 1, 128>}, {transform_indices = @transform_3, window_bounds = array<i64: 1, 128>}, {transform_indices = @transform_4, window_bounds = array<i64: 512, 128>}]} {
    %c0 = arith.constant 0 : index
    %c0_0 = arith.constant 0 : index
    %0 = vector.load %arg3[%c0, %c0_0] : memref<512x128xbf16, #tpu.memory_space<vmem>>, vector<512x128xbf16>
    %c0_1 = arith.constant 0 : index
    %c0_2 = arith.constant 0 : index
    %1 = vector.load %arg4[%c0_1, %c0_2] : memref<128x128xbf16, #tpu.memory_space<vmem>>, vector<128x128xbf16>
    %cst = arith.constant dense<0.000000e+00> : vector<512x128xf32>
    %2 = tpu.matmul %0, %1, %cst {dimension_numbers = #tpu.dot_dimension_numbers<[1], [0], [0], [1], [0, 0, 1, 1], [], []>} : vector<512x128xbf16>, vector<128x128xbf16>, vector<512x128xf32> -> vector<512x128xf32>
    %c0_3 = arith.constant 0 : index
    %c0_4 = arith.constant 0 : index
    %3 = vector.load %arg5[%c0_3, %c0_4] : memref<1x128xf32, #tpu.memory_space<vmem>>, vector<1x128xf32>
    %4 = vector.broadcast %3 : vector<1x128xf32> to vector<512x128xf32>
    %5 = arith.mulf %2, %4 : vector<512x128xf32>
    %c0_5 = arith.constant 0 : index
    %c0_6 = arith.constant 0 : index
    %6 = vector.load %arg6[%c0_5, %c0_6] : memref<1x128xf32, #tpu.memory_space<vmem>>, vector<1x128xf32>
    %7 = vector.broadcast %6 : vector<1x128xf32> to vector<512x128xf32>
    %8 = arith.addf %5, %7 : vector<512x128xf32>
    %cst_7 = arith.constant 0.000000e+00 : f32
    %9 = vector.broadcast %cst_7 : f32 to vector<512x128xf32>
    %10 = arith.maximumf %8, %9 : vector<512x128xf32>
    %c0_8 = arith.constant 0 : index
    %c0_9 = arith.constant 0 : index
    %11 = vector.load %arg7[%c0_8, %c0_9] : memref<512x128xf32, #tpu.memory_space<vmem>>, vector<512x128xf32>
    tpu.vector_store %arg7[%c0_8, %c0_9], %10 {strides = array<i32>} : memref<512x128xf32, #tpu.memory_space<vmem>>, vector<512x128xf32>,
    return
  }
  func.func @transform_0(%arg0: i32, %arg1: i32, %arg2: i32) -> (i32, i32) {
    %c0_i32 = arith.constant 0 : i32
    return %arg1, %arg2 : i32, i32
  }
  func.func @transform_1(%arg0: i32, %arg1: i32, %arg2: i32) -> (i32, i32) {
    %c0_i32 = arith.constant 0 : i32
    %c0_i32_0 = arith.constant 0 : i32
    return %c0_i32, %arg0 : i32, i32
  }
  func.func @transform_2(%arg0: i32, %arg1: i32, %arg2: i32) -> (i32, i32) {
    %c0_i32 = arith.constant 0 : i32
    %c0_i32_0 = arith.constant 0 : i32
    return %c0_i32, %arg0 : i32, i32
  }
  func.func @transform_3(%arg0: i32, %arg1: i32, %arg2: i32) -> (i32, i32) {
    %c0_i32 = arith.constant 0 : i32
    %c0_i32_0 = arith.constant 0 : i32
    return %c0_i32, %arg0 : i32, i32
  }
  func.func @transform_4(%arg0: i32, %arg1: i32, %arg2: i32) -> (i32, i32) {
    %c0_i32 = arith.constant 0 : i32
    return %arg1, %arg0 : i32, i32
  }
}

</mosaic_0001>

<llo_original>
// kernel: conv_forward.1
$region0: #{conv_forward.1}
  #allocation0 [shape = 'u32[]', space=smem, size = 0x4, offset = 0x4, fixed_abs, tag = 'smem constant byte address 0x4 - core index']
  #allocation1 [shape = 'u32[144,128]{1,0:T(1,128)}', space=vmem, size = 0x12000, scoped, tag = 'internal scratch']
  %s0 = inlined_call_operand.vmem [shape: bf16[512,128], index: 0, kind: input, shape index: {}]
  %s1 = inlined_call_operand.vmem [shape: bf16[128,128], index: 1, kind: input, shape index: {}]
  %s2 = inlined_call_operand.vmem [shape: f32[1,128], index: 2, kind: input, shape index: {}]
  %s3 = inlined_call_operand.vmem [shape: f32[1,128], index: 3, kind: input, shape index: {}]
  %s4 = inlined_call_operand.vmem [shape: f32[512,128], index: 4, kind: output, shape index: {}]
  %s5 = sld [smem:[#allocation0]]
  $region26: #{conv_forward.1} parent=0
    _
  %s7 = ssub.s32 1, %s5
  %s8 = scalar_select 0, %s7, %s5
  // Predicated region
  $region2: #{conv_forward.1} parent=0 // pred_check
    _
  $region3: #{conv_forward.1} parent=0 // pred_check_branch
    %10 = sbr.rel (0) target = $region5
  $region4: #{conv_forward.1} parent=0 // pred_region
    _
  $region5: #{conv_forward.1} parent=0 // pred_fallthru
    _
  // Predicated region
  $region6: #{conv_forward.1} parent=0 // pred_check
    _
  $region7: #{conv_forward.1} parent=0 // pred_check_branch
    %12 = sbr.rel (0) target = $region9
  $region8: #{conv_forward.1} parent=0 // pred_region
    _
  $region9: #{conv_forward.1} parent=0 // pred_fallthru
    _
  // Predicated region
  $region10: #{conv_forward.1} parent=0 // pred_check
    _
  $region11: #{conv_forward.1} parent=0 // pred_check_branch
    %14 = sbr.rel (0) target = $region13
  $region12: #{conv_forward.1} parent=0 // pred_region
    _
  $region13: #{conv_forward.1} parent=0 // pred_fallthru
    _
  // Predicated region
  $region14: #{conv_forward.1} parent=0 // pred_check
    _
  $region15: #{conv_forward.1} parent=0 // pred_check_branch
    %16 = sbr.rel (0) target = $region17
  $region16: #{conv_forward.1} parent=0 // pred_region
    _
  $region17: #{conv_forward.1} parent=0 // pred_fallthru
    _
  %v18 = vld [vmem:[%s0] sm:$0xf]
  %v19 = vld [vmem:[%s0 + $0x4] sm:$0xf]
  %v20 = vld [vmem:[%s0 + $0x8] sm:$0xf]
  %v21 = vld [vmem:[%s0 + $0xc] sm:$0xf]
  %v22 = vld [vmem:[%s0 + $0x10] sm:$0xf]
  %v23 = vld [vmem:[%s0 + $0x14] sm:$0xf]
  %v24 = vld [vmem:[%s0 + $0x18] sm:$0xf]
  %v25 = vld [vmem:[%s0 + $0x1c] sm:$0xf]
  %v26 = vld [vmem:[%s0 + $0x20] sm:$0xf]
  %v27 = vld [vmem:[%s0 + $0x24] sm:$0xf]
  %v28 = vld [vmem:[%s0 + $0x28] sm:$0xf]
  %v29 = vld [vmem:[%s0 + $0x2c] sm:$0xf]
  %v30 = vld [vmem:[%s0 + $0x30] sm:$0xf]
  %v31 = vld [vmem:[%s0 + $0x34] sm:$0xf]
  %v32 = vld [vmem:[%s0 + $0x38] sm:$0xf]
  %v33 = vld [vmem:[%s0 + $0x3c] sm:$0xf]
  %v34 = vld [vmem:[%s0 + $0x40] sm:$0xf]
  %v35 = vld [vmem:[%s0 + $0x44] sm:$0xf]
  %v36 = vld [vmem:[%s0 + $0x48] sm:$0xf]
  %v37 = vld [vmem:[%s0 + $0x4c] sm:$0xf]
  %v38 = vld [vmem:[%s0 + $0x50] sm:$0xf]
  %v39 = vld [vmem:[%s0 + $0x54] sm:$0xf]
  %v40 = vld [vmem:[%s0 + $0x58] sm:$0xf]
  %v41 = vld [vmem:[%s0 + $0x5c] sm:$0xf]
  %v42 = vld [vmem:[%s0 + $0x60] sm:$0xf]
  %v43 = vld [vmem:[%s0 + $0x64] sm:$0xf]
  %v44 = vld [vmem:[%s0 + $0x68] sm:$0xf]
  %v45 = vld [vmem:[%s0 + $0x6c] sm:$0xf]
  %v46 = vld [vmem:[%s0 + $0x70] sm:$0xf]
  %v47 = vld [vmem:[%s0 + $0x74] sm:$0xf]
  %v48 = vld [vmem:[%s0 + $0x78] sm:$0xf]
  %v49 = vld [vmem:[%s0 + $0x7c] sm:$0xf]
  %v50 = vld [vmem:[%s0 + $0x80] sm:$0xf]
  %v51 = vld [vmem:[%s0 + $0x84] sm:$0xf]
  %v52 = vld [vmem:[%s0 + $0x88] sm:$0xf]
  %v53 = vld [vmem:[%s0 + $0x8c] sm:$0xf]
  %v54 = vld [vmem:[%s0 + $0x90] sm:$0xf]
  %v55 = vld [vmem:[%s0 + $0x94] sm:$0xf]
  %v56 = vld [vmem:[%s0 + $0x98] sm:$0xf]
  %v57 = vld [vmem:[%s0 + $0x9c] sm:$0xf]
  %v58 = vld [vmem:[%s0 + $0xa0] sm:$0xf]
  %v59 = vld [vmem:[%s0 + $0xa4] sm:$0xf]
  %v60 = vld [vmem:[%s0 + $0xa8] sm:$0xf]
  %v61 = vld [vmem:[%s0 + $0xac] sm:$0xf]
  %v62 = vld [vmem:[%s0 + $0xb0] sm:$0xf]
  %v63 = vld [vmem:[%s0 + $0xb4] sm:$0xf]
  %v64 = vld [vmem:[%s0 + $0xb8] sm:$0xf]
  %v65 = vld [vmem:[%s0 + $0xbc] sm:$0xf]
  %v66 = vld [vmem:[%s0 + $0xc0] sm:$0xf]
  %v67 = vld [vmem:[%s0 + $0xc4] sm:$0xf]
  %v68 = vld [vmem:[%s0 + $0xc8] sm:$0xf]
  %v69 = vld [vmem:[%s0 + $0xcc] sm:$0xf]
  %v70 = vld [vmem:[%s0 + $0xd0] sm:$0xf]
  %v71 = vld [vmem:[%s0 + $0xd4] sm:$0xf]
  %v72 = vld [vmem:[%s0 + $0xd8] sm:$0xf]
  %v73 = vld [vmem:[%s0 + $0xdc] sm:$0xf]
  %v74 = vld [vmem:[%s0 + $0xe0] sm:$0xf]
  %v75 = vld [vmem:[%s0 + $0xe4] sm:$0xf]
  %v76 = vld [vmem:[%s0 + $0xe8] sm:$0xf]
  %v77 = vld [vmem:[%s0 + $0xec] sm:$0xf]
  %v78 = vld [vmem:[%s0 + $0xf0] sm:$0xf]
  %v79 = vld [vmem:[%s0 + $0xf4] sm:$0xf]
  %v80 = vld [vmem:[%s0 + $0xf8] sm:$0xf]
  %v81 = vld [vmem:[%s0 + $0xfc] sm:$0xf]
  %v82 = vld [vmem:[%s1] sm:$0xf]
  %v83 = vld [vmem:[%s1 + $0x4] sm:$0xf]
  %v84 = vld [vmem:[%s1 + $0x8] sm:$0xf]
  %v85 = vld [vmem:[%s1 + $0xc] sm:$0xf]
  %v86 = vld [vmem:[%s1 + $0x10] sm:$0xf]
  %v87 = vld [vmem:[%s1 + $0x14] sm:$0xf]
  %v88 = vld [vmem:[%s1 + $0x18] sm:$0xf]
  %v89 = vld [vmem:[%s1 + $0x1c] sm:$0xf]
  %v90 = vld [vmem:[%s1 + $0x20] sm:$0xf]
  %v91 = vld [vmem:[%s1 + $0x24] sm:$0xf]
  %v92 = vld [vmem:[%s1 + $0x28] sm:$0xf]
  %v93 = vld [vmem:[%s1 + $0x2c] sm:$0xf]
  %v94 = vld [vmem:[%s1 + $0x30] sm:$0xf]
  %v95 = vld [vmem:[%s1 + $0x34] sm:$0xf]
  %v96 = vld [vmem:[%s1 + $0x38] sm:$0xf]
  %v97 = vld [vmem:[%s1 + $0x3c] sm:$0xf]
  %v162 = vunpack.c.l.b16 %v18
  %v163 = vunpack.c.l.b16 %v19
  %v164 = vunpack.c.l.b16 %v20
  %v165 = vunpack.c.l.b16 %v21
  %v166 = vunpack.c.l.b16 %v22
  %v167 = vunpack.c.l.b16 %v23
  %v168 = vunpack.c.l.b16 %v24
  %v169 = vunpack.c.l.b16 %v25
  %v170 = vunpack.c.l.b16 %v26
  %v171 = vunpack.c.l.b16 %v27
  %v172 = vunpack.c.l.b16 %v28
  %v173 = vunpack.c.l.b16 %v29
  %v174 = vunpack.c.l.b16 %v30
  %v175 = vunpack.c.l.b16 %v31
  %v176 = vunpack.c.l.b16 %v32
  %v177 = vunpack.c.l.b16 %v33
  %v178 = vunpack.c.l.b16 %v34
  %v179 = vunpack.c.l.b16 %v35
  %v180 = vunpack.c.l.b16 %v36
  %v181 = vunpack.c.l.b16 %v37
  %v182 = vunpack.c.l.b16 %v38
  %v183 = vunpack.c.l.b16 %v39
  %v184 = vunpack.c.l.b16 %v40
  %v185 = vunpack.c.l.b16 %v41
  %v186 = vunpack.c.l.b16 %v42
  %v187 = vunpack.c.l.b16 %v43
  %v188 = vunpack.c.l.b16 %v44
  %v189 = vunpack.c.l.b16 %v45
  %v190 = vunpack.c.l.b16 %v46
  %v191 = vunpack.c.l.b16 %v47
  %v192 = vunpack.c.l.b16 %v48
  %v193 = vunpack.c.l.b16 %v49
  %v194 = vunpack.c.l.b16 %v50
  %v195 = vunpack.c.l.b16 %v51
  %v196 = vunpack.c.l.b16 %v52
  %v197 = vunpack.c.l.b16 %v53
  %v198 = vunpack.c.l.b16 %v54
  %v199 = vunpack.c.l.b16 %v55
  %v200 = vunpack.c.l.b16 %v56
  %v201 = vunpack.c.l.b16 %v57
  %v202 = vunpack.c.l.b16 %v58
  %v203 = vunpack.c.l.b16 %v59
  %v204 = vunpack.c.l.b16 %v60
  %v205 = vunpack.c.l.b16 %v61
  %v206 = vunpack.c.l.b16 %v62
  %v207 = vunpack.c.l.b16 %v63
  %v208 = vunpack.c.l.b16 %v64
  %v209 = vunpack.c.l.b16 %v65
  %v210 = vunpack.c.l.b16 %v66
  %v211 = vunpack.c.l.b16 %v67
  %v212 = vunpack.c.l.b16 %v68
  %v213 = vunpack.c.l.b16 %v69
  %v214 = vunpack.c.l.b16 %v70
  %v215 = vunpack.c.l.b16 %v71
  %v216 = vunpack.c.l.b16 %v72
  %v217 = vunpack.c.l.b16 %v73
  %v218 = vunpack.c.l.b16 %v74
  %v219 = vunpack.c.l.b16 %v75
  %v220 = vunpack.c.l.b16 %v76
  %v221 = vunpack.c.l.b16 %v77
  %v222 = vunpack.c.l.b16 %v78
  %v223 = vunpack.c.l.b16 %v79
  %v224 = vunpack.c.l.b16 %v80
  %v225 = vunpack.c.l.b16 %v81
  %v226 = vpack.c.b16 %v163, %v162
  %v227 = vpack.c.b16 %v165, %v164
  %v228 = vpack.c.b16 %v167, %v166
  %v229 = vpack.c.b16 %v169, %v168
  %v230 = vpack.c.b16 %v171, %v170
  %v231 = vpack.c.b16 %v173, %v172
  %v232 = vpack.c.b16 %v175, %v174
  %v233 = vpack.c.b16 %v177, %v176
  %v234 = vpack.c.b16 %v179, %v178
  %v235 = vpack.c.b16 %v181, %v180
  %v236 = vpack.c.b16 %v183, %v182
  %v237 = vpack.c.b16 %v185, %v184
  %v238 = vpack.c.b16 %v187, %v186
  %v239 = vpack.c.b16 %v189, %v188
  %v240 = vpack.c.b16 %v191, %v190
  %v241 = vpack.c.b16 %v193, %v192
  %v242 = vpack.c.b16 %v195, %v194
  %v243 = vpack.c.b16 %v197, %v196
  %v244 = vpack.c.b16 %v199, %v198
  %v245 = vpack.c.b16 %v201, %v200
  %v246 = vpack.c.b16 %v203, %v202
  %v247 = vpack.c.b16 %v205, %v204
  %v248 = vpack.c.b16 %v207, %v206
  %v249 = vpack.c.b16 %v209, %v208
  %v250 = vpack.c.b16 %v211, %v210
  %v251 = vpack.c.b16 %v213, %v212
  %v252 = vpack.c.b16 %v215, %v214
  %v253 = vpack.c.b16 %v217, %v216
  %v254 = vpack.c.b16 %v219, %v218
  %v255 = vpack.c.b16 %v221, %v220
  %v256 = vpack.c.b16 %v223, %v222
  %v257 = vpack.c.b16 %v225, %v224
  %v306 = vunpack.c.l.b16 %v82
  %v307 = vunpack.c.l.b16 %v83
  %v308 = vunpack.c.l.b16 %v84
  %v309 = vunpack.c.l.b16 %v85
  %v310 = vunpack.c.l.b16 %v86
  %v311 = vunpack.c.l.b16 %v87
  %v312 = vunpack.c.l.b16 %v88
  %v313 = vunpack.c.l.b16 %v89
  %v314 = vunpack.c.l.b16 %v90
  %v315 = vunpack.c.l.b16 %v91
  %v316 = vunpack.c.l.b16 %v92
  %v317 = vunpack.c.l.b16 %v93
  %v318 = vunpack.c.l.b16 %v94
  %v319 = vunpack.c.l.b16 %v95
  %v320 = vunpack.c.l.b16 %v96
  %v321 = vunpack.c.l.b16 %v97
  %v322 = vpack.c.b16 %v307, %v306
  %v323 = vpack.c.b16 %v309, %v308
  %v324 = vpack.c.b16 %v311, %v310
  %v325 = vpack.c.b16 %v313, %v312
  %v326 = vpack.c.b16 %v315, %v314
  %v327 = vpack.c.b16 %v317, %v316
  %v328 = vpack.c.b16 %v319, %v318
  %v329 = vpack.c.b16 %v321, %v320
  %338 = vmatprep.subr.bf16.mxu0 0
  %339 = vmatpush1.bf16.msra.mxu0 %v329
  %340 = vmatprep.subr.bf16.mxu0 0
  %341 = vmatpush1.bf16.msra.mxu0 %v328
  %342 = vmatprep.subr.bf16.mxu0 0
  %343 = vmatpush1.bf16.msra.mxu0 %v327
  %344 = vmatprep.subr.bf16.mxu0 0
  %345 = vmatpush1.bf16.msra.mxu0 %v326
  %346 = vmatprep.subr.bf16.mxu0 0
  %347 = vmatpush1.bf16.msra.mxu0 %v325
  %348 = vmatprep.subr.bf16.mxu0 0
  %349 = vmatpush1.bf16.msra.mxu0 %v324
  %350 = vmatprep.subr.bf16.mxu0 0
  %351 = vmatpush1.bf16.msra.mxu0 %v323
  %352 = vmatprep.subr.bf16.mxu0 0
  %353 = vmatpush1.bf16.msra.mxu0 %v322
  %354 = vmatprep.subr.bf16.mxu0 0
  %355 = vmatpush2.bf16.msra.mxu0 0
  %356 = vmatprep.subr.bf16.mxu0 0
  %357 = vmatpush2.bf16.msra.mxu0 0
  %358 = vmatprep.subr.bf16.mxu0 0
  %359 = vmatpush2.bf16.msra.mxu0 0
  %360 = vmatprep.subr.bf16.mxu0 0
  %361 = vmatpush2.bf16.msra.mxu0 0
  %362 = vmatprep.subr.bf16.mxu0 0
  %363 = vmatpush2.bf16.msra.mxu0 0
  %364 = vmatprep.subr.bf16.mxu0 0
  %365 = vmatpush2.bf16.msra.mxu0 0
  %366 = vmatprep.subr.bf16.mxu0 0
  %367 = vmatpush2.bf16.msra.mxu0 0
  %368 = vmatprep.subr.bf16.mxu0 0
  %369 = vmatpush2.bf16.msra.mxu0 0
  %370 = vmatprep.mubr.bf16.mxu0 0
  %371 = vmatmul.mubr.bf16.gmra.mxu0 %v226
  %v372 = vpop.f32.mrf.mxu0
  %v373 = vadd.f32 0.0, %v372
  %v374 = vpop.f32.mrf.mxu0
  %v375 = vpop.f32.mrf.mxu0
  %v376 = vadd.f32 0.0, %v375
  %v377 = vpop.f32.mrf.mxu0
  %378 = vmatprep.mubr.bf16.mxu0 0
  %379 = vmatmul.mubr.bf16.gmra.mxu0 %v227
  %v380 = vpop.f32.mrf.mxu0
  %v381 = vadd.f32 0.0, %v380
  %v382 = vpop.f32.mrf.mxu0
  %v383 = vpop.f32.mrf.mxu0
  %v384 = vadd.f32 0.0, %v383
  %v385 = vpop.f32.mrf.mxu0
  %386 = vmatprep.mubr.bf16.mxu0 0
  %387 = vmatmul.mubr.bf16.gmra.mxu0 %v228
  %v388 = vpop.f32.mrf.mxu0
  %v389 = vadd.f32 0.0, %v388
  %v390 = vpop.f32.mrf.mxu0
  %v391 = vpop.f32.mrf.mxu0
  %v392 = vadd.f32 0.0, %v391
  %v393 = vpop.f32.mrf.mxu0
  %394 = vmatprep.mubr.bf16.mxu0 0
  %395 = vmatmul.mubr.bf16.gmra.mxu0 %v229
  %v396 = vpop.f32.mrf.mxu0
  %v397 = vadd.f32 0.0, %v396
  %v398 = vpop.f32.mrf.mxu0
  %v399 = vpop.f32.mrf.mxu0
  %v400 = vadd.f32 0.0, %v399
  %v401 = vpop.f32.mrf.mxu0
  %402 = vmatprep.mubr.bf16.mxu0 0
  %403 = vmatmul.mubr.bf16.gmra.mxu0 %v230
  %v404 = vpop.f32.mrf.mxu0
  %v405 = vadd.f32 0.0, %v404
  %v406 = vpop.f32.mrf.mxu0
  %v407 = vpop.f32.mrf.mxu0
  %v408 = vadd.f32 0.0, %v407
  %v409 = vpop.f32.mrf.mxu0
  %410 = vmatprep.mubr.bf16.mxu0 0
  %411 = vmatmul.mubr.bf16.gmra.mxu0 %v231
  %v412 = vpop.f32.mrf.mxu0
  %v413 = vadd.f32 0.0, %v412
  %v414 = vpop.f32.mrf.mxu0
  %v415 = vpop.f32.mrf.mxu0
  %v416 = vadd.f32 0.0, %v415
  %v417 = vpop.f32.mrf.mxu0
  %418 = vmatprep.mubr.bf16.mxu0 0
  %419 = vmatmul.mubr.bf16.gmra.mxu0 %v232
  %v420 = vpop.f32.mrf.mxu0
  %v421 = vadd.f32 0.0, %v420
  %v422 = vpop.f32.mrf.mxu0
  %v423 = vpop.f32.mrf.mxu0
  %v424 = vadd.f32 0.0, %v423
  %v425 = vpop.f32.mrf.mxu0
  %426 = vmatprep.mubr.bf16.mxu0 0
  %427 = vmatmul.mubr.bf16.gmra.mxu0 %v233
  %v428 = vpop.f32.mrf.mxu0
  %v429 = vadd.f32 0.0, %v428
  %v430 = vpop.f32.mrf.mxu0
  %v431 = vpop.f32.mrf.mxu0
  %v432 = vadd.f32 0.0, %v431
  %v433 = vpop.f32.mrf.mxu0
  %434 = vmatprep.mubr.bf16.mxu0 0
  %435 = vmatmul.mubr.bf16.gmra.mxu0 %v234
  %v436 = vpop.f32.mrf.mxu0
  %v437 = vadd.f32 0.0, %v436
  %v438 = vpop.f32.mrf.mxu0
  %v439 = vpop.f32.mrf.mxu0
  %v440 = vadd.f32 0.0, %v439
  %v441 = vpop.f32.mrf.mxu0
  %442 = vmatprep.mubr.bf16.mxu0 0
  %443 = vmatmul.mubr.bf16.gmra.mxu0 %v235
  %v444 = vpop.f32.mrf.mxu0
  %v445 = vadd.f32 0.0, %v444
  %v446 = vpop.f32.mrf.mxu0
  %v447 = vpop.f32.mrf.mxu0
  %v448 = vadd.f32 0.0, %v447
  %v449 = vpop.f32.mrf.mxu0
  %450 = vmatprep.mubr.bf16.mxu0 0
  %451 = vmatmul.mubr.bf16.gmra.mxu0 %v236
  %v452 = vpop.f32.mrf.mxu0
  %v453 = vadd.f32 0.0, %v452
  %v454 = vpop.f32.mrf.mxu0
  %v455 = vpop.f32.mrf.mxu0
  %v456 = vadd.f32 0.0, %v455
  %v457 = vpop.f32.mrf.mxu0
  %458 = vmatprep.mubr.bf16.mxu0 0
  %459 = vmatmul.mubr.bf16.gmra.mxu0 %v237
  %v460 = vpop.f32.mrf.mxu0
  %v461 = vadd.f32 0.0, %v460
  %v462 = vpop.f32.mrf.mxu0
  %v463 = vpop.f32.mrf.mxu0
  %v464 = vadd.f32 0.0, %v463
  %v465 = vpop.f32.mrf.mxu0
  %466 = vmatprep.mubr.bf16.mxu0 0
  %467 = vmatmul.mubr.bf16.gmra.mxu0 %v238
  %v468 = vpop.f32.mrf.mxu0
  %v469 = vadd.f32 0.0, %v468
  %v470 = vpop.f32.mrf.mxu0
  %v471 = vpop.f32.mrf.mxu0
  %v472 = vadd.f32 0.0, %v471
  %v473 = vpop.f32.mrf.mxu0
  %474 = vmatprep.mubr.bf16.mxu0 0
  %475 = vmatmul.mubr.bf16.gmra.mxu0 %v239
  %v476 = vpop.f32.mrf.mxu0
  %v477 = vadd.f32 0.0, %v476
  %v478 = vpop.f32.mrf.mxu0
  %v479 = vpop.f32.mrf.mxu0
  %v480 = vadd.f32 0.0, %v479
  %v481 = vpop.f32.mrf.mxu0
  %482 = vmatprep.mubr.bf16.mxu0 0
  %483 = vmatmul.mubr.bf16.gmra.mxu0 %v240
  %v484 = vpop.f32.mrf.mxu0
  %v485 = vadd.f32 0.0, %v484
  %v486 = vpop.f32.mrf.mxu0
  %v487 = vpop.f32.mrf.mxu0
  %v488 = vadd.f32 0.0, %v487
  %v489 = vpop.f32.mrf.mxu0
  %490 = vmatprep.mubr.bf16.mxu0 0
  %491 = vmatmul.mubr.bf16.gmra.mxu0 %v241
  %v492 = vpop.f32.mrf.mxu0
  %v493 = vadd.f32 0.0, %v492
  %v494 = vpop.f32.mrf.mxu0
  %v495 = vpop.f32.mrf.mxu0
  %v496 = vadd.f32 0.0, %v495
  %v497 = vpop.f32.mrf.mxu0
  %498 = vmatprep.mubr.bf16.mxu0 0
  %499 = vmatmul.mubr.bf16.gmra.mxu0 %v242
  %v500 = vpop.f32.mrf.mxu0
  %v501 = vadd.f32 0.0, %v500
  %v502 = vpop.f32.mrf.mxu0
  %v503 = vpop.f32.mrf.mxu0
  %v504 = vadd.f32 0.0, %v503
  %v505 = vpop.f32.mrf.mxu0
  %506 = vmatprep.mubr.bf16.mxu0 0
  %507 = vmatmul.mubr.bf16.gmra.mxu0 %v243
  %v508 = vpop.f32.mrf.mxu0
  %v509 = vadd.f32 0.0, %v508
  %v510 = vpop.f32.mrf.mxu0
  %v511 = vpop.f32.mrf.mxu0
  %v512 = vadd.f32 0.0, %v511
  %v513 = vpop.f32.mrf.mxu0
  %514 = vmatprep.mubr.bf16.mxu0 0
  %515 = vmatmul.mubr.bf16.gmra.mxu0 %v244
  %v516 = vpop.f32.mrf.mxu0
  %v517 = vadd.f32 0.0, %v516
  %v518 = vpop.f32.mrf.mxu0
  %v519 = vpop.f32.mrf.mxu0
  %v520 = vadd.f32 0.0, %v519
  %v521 = vpop.f32.mrf.mxu0
  %522 = vmatprep.mubr.bf16.mxu0 0
  %523 = vmatmul.mubr.bf16.gmra.mxu0 %v245
  %v524 = vpop.f32.mrf.mxu0
  %v525 = vadd.f32 0.0, %v524
  %v526 = vpop.f32.mrf.mxu0
  %v527 = vpop.f32.mrf.mxu0
  %v528 = vadd.f32 0.0, %v527
  %v529 = vpop.f32.mrf.mxu0
  %530 = vmatprep.mubr.bf16.mxu0 0
  %531 = vmatmul.mubr.bf16.gmra.mxu0 %v246
  %v532 = vpop.f32.mrf.mxu0
  %v533 = vadd.f32 0.0, %v532
  %v534 = vpop.f32.mrf.mxu0
  %v535 = vpop.f32.mrf.mxu0
  %v536 = vadd.f32 0.0, %v535
  %v537 = vpop.f32.mrf.mxu0
  %538 = vmatprep.mubr.bf16.mxu0 0
  %539 = vmatmul.mubr.bf16.gmra.mxu0 %v247
  %v540 = vpop.f32.mrf.mxu0
  %v541 = vadd.f32 0.0, %v540
  %v542 = vpop.f32.mrf.mxu0
  %v543 = vpop.f32.mrf.mxu0
  %v544 = vadd.f32 0.0, %v543
  %v545 = vpop.f32.mrf.mxu0
  %546 = vmatprep.mubr.bf16.mxu0 0
  %547 = vmatmul.mubr.bf16.gmra.mxu0 %v248
  %v548 = vpop.f32.mrf.mxu0
  %v549 = vadd.f32 0.0, %v548
  %v550 = vpop.f32.mrf.mxu0
  %v551 = vpop.f32.mrf.mxu0
  %v552 = vadd.f32 0.0, %v551
  %v553 = vpop.f32.mrf.mxu0
  %554 = vmatprep.mubr.bf16.mxu0 0
  %555 = vmatmul.mubr.bf16.gmra.mxu0 %v249
  %v556 = vpop.f32.mrf.mxu0
  %v557 = vadd.f32 0.0, %v556
  %v558 = vpop.f32.mrf.mxu0
  %v559 = vpop.f32.mrf.mxu0
  %v560 = vadd.f32 0.0, %v559
  %v561 = vpop.f32.mrf.mxu0
  %562 = vmatprep.mubr.bf16.mxu0 0
  %563 = vmatmul.mubr.bf16.gmra.mxu0 %v250
  %v564 = vpop.f32.mrf.mxu0
  %v565 = vadd.f32 0.0, %v564
  %v566 = vpop.f32.mrf.mxu0
  %v567 = vpop.f32.mrf.mxu0
  %v568 = vadd.f32 0.0, %v567
  %v569 = vpop.f32.mrf.mxu0
  %570 = vmatprep.mubr.bf16.mxu0 0
  %571 = vmatmul.mubr.bf16.gmra.mxu0 %v251
  %v572 = vpop.f32.mrf.mxu0
  %v573 = vadd.f32 0.0, %v572
  %v574 = vpop.f32.mrf.mxu0
  %v575 = vpop.f32.mrf.mxu0
  %v576 = vadd.f32 0.0, %v575
  %v577 = vpop.f32.mrf.mxu0
  %578 = vmatprep.mubr.bf16.mxu0 0
  %579 = vmatmul.mubr.bf16.gmra.mxu0 %v252
  %v580 = vpop.f32.mrf.mxu0
  %v581 = vadd.f32 0.0, %v580
  %v582 = vpop.f32.mrf.mxu0
  %v583 = vpop.f32.mrf.mxu0
  %v584 = vadd.f32 0.0, %v583
  %v585 = vpop.f32.mrf.mxu0
  %586 = vmatprep.mubr.bf16.mxu0 0
  %587 = vmatmul.mubr.bf16.gmra.mxu0 %v253
  %v588 = vpop.f32.mrf.mxu0
  %v589 = vadd.f32 0.0, %v588
  %v590 = vpop.f32.mrf.mxu0
  %v591 = vpop.f32.mrf.mxu0
  %v592 = vadd.f32 0.0, %v591
  %v593 = vpop.f32.mrf.mxu0
  %594 = vmatprep.mubr.bf16.mxu0 0
  %595 = vmatmul.mubr.bf16.gmra.mxu0 %v254
  %v596 = vpop.f32.mrf.mxu0
  %v597 = vadd.f32 0.0, %v596
  %v598 = vpop.f32.mrf.mxu0
  %v599 = vpop.f32.mrf.mxu0
  %v600 = vadd.f32 0.0, %v599
  %v601 = vpop.f32.mrf.mxu0
  %602 = vmatprep.mubr.bf16.mxu0 0
  %603 = vmatmul.mubr.bf16.gmra.mxu0 %v255
  %v604 = vpop.f32.mrf.mxu0
  %v605 = vadd.f32 0.0, %v604
  %v606 = vpop.f32.mrf.mxu0
  %v607 = vpop.f32.mrf.mxu0
  %v608 = vadd.f32 0.0, %v607
  %v609 = vpop.f32.mrf.mxu0
  %610 = vmatprep.mubr.bf16.mxu0 0
  %611 = vmatmul.mubr.bf16.gmra.mxu0 %v256
  %v612 = vpop.f32.mrf.mxu0
  %v613 = vadd.f32 0.0, %v612
  %v614 = vpop.f32.mrf.mxu0
  %v615 = vpop.f32.mrf.mxu0
  %v616 = vadd.f32 0.0, %v615
  %v617 = vpop.f32.mrf.mxu0
  %618 = vmatprep.mubr.bf16.mxu0 0
  %619 = vmatmul.mubr.bf16.gmra.mxu0 %v257
  %v620 = vpop.f32.mrf.mxu0
  %v621 = vadd.f32 0.0, %v620
  %v622 = vpop.f32.mrf.mxu0
  %v623 = vpop.f32.mrf.mxu0
  %v624 = vadd.f32 0.0, %v623
  %v625 = vpop.f32.mrf.mxu0
  %626 = vdwg.mxu0
  %v627 = vld [vmem:[%s2] sm:$0x1]
  %v629 = vlaneseq
  %v630 = vshrl.u32 %v629, 7
  %v631 = vsub.s32 0, %v630
  %v632 = vrot.slane %v627, %v631
  %v634 = vmul.f32 %v373, %v632
  %v635 = vmul.f32 %v376, %v632
  %v636 = vmul.f32 %v381, %v632
  %v637 = vmul.f32 %v384, %v632
  %v638 = vmul.f32 %v389, %v632
  %v639 = vmul.f32 %v392, %v632
  %v640 = vmul.f32 %v397, %v632
  %v641 = vmul.f32 %v400, %v632
  %v642 = vmul.f32 %v405, %v632
  %v643 = vmul.f32 %v408, %v632
  %v644 = vmul.f32 %v413, %v632
  %v645 = vmul.f32 %v416, %v632
  %v646 = vmul.f32 %v421, %v632
  %v647 = vmul.f32 %v424, %v632
  %v648 = vmul.f32 %v429, %v632
  %v649 = vmul.f32 %v432, %v632
  %v650 = vmul.f32 %v437, %v632
  %v651 = vmul.f32 %v440, %v632
  %v652 = vmul.f32 %v445, %v632
  %v653 = vmul.f32 %v448, %v632
  %v654 = vmul.f32 %v453, %v632
  %v655 = vmul.f32 %v456, %v632
  %v656 = vmul.f32 %v461, %v632
  %v657 = vmul.f32 %v464, %v632
  %v658 = vmul.f32 %v469, %v632
  %v659 = vmul.f32 %v472, %v632
  %v660 = vmul.f32 %v477, %v632
  %v661 = vmul.f32 %v480, %v632
  %v662 = vmul.f32 %v485, %v632
  %v663 = vmul.f32 %v488, %v632
  %v664 = vmul.f32 %v493, %v632
  %v665 = vmul.f32 %v496, %v632
  %v666 = vmul.f32 %v501, %v632
  %v667 = vmul.f32 %v504, %v632
  %v668 = vmul.f32 %v509, %v632
  %v669 = vmul.f32 %v512, %v632
  %v670 = vmul.f32 %v517, %v632
  %v671 = vmul.f32 %v520, %v632
  %v672 = vmul.f32 %v525, %v632
  %v673 = vmul.f32 %v528, %v632
  %v674 = vmul.f32 %v533, %v632
  %v675 = vmul.f32 %v536, %v632
  %v676 = vmul.f32 %v541, %v632
  %v677 = vmul.f32 %v544, %v632
  %v678 = vmul.f32 %v549, %v632
  %v679 = vmul.f32 %v552, %v632
  %v680 = vmul.f32 %v557, %v632
  %v681 = vmul.f32 %v560, %v632
  %v682 = vmul.f32 %v565, %v632
  %v683 = vmul.f32 %v568, %v632
  %v684 = vmul.f32 %v573, %v632
  %v685 = vmul.f32 %v576, %v632
  %v686 = vmul.f32 %v581, %v632
  %v687 = vmul.f32 %v584, %v632
  %v688 = vmul.f32 %v589, %v632
  %v689 = vmul.f32 %v592, %v632
  %v690 = vmul.f32 %v597, %v632
  %v691 = vmul.f32 %v600, %v632
  %v692 = vmul.f32 %v605, %v632
  %v693 = vmul.f32 %v608, %v632
  %v694 = vmul.f32 %v613, %v632
  %v695 = vmul.f32 %v616, %v632
  %v696 = vmul.f32 %v621, %v632
  %v697 = vmul.f32 %v624, %v632
  %v698 = vld [vmem:[%s3] sm:$0x1]
  %v700 = vlaneseq
  %v701 = vshrl.u32 %v700, 7
  %v702 = vsub.s32 0, %v701
  %v703 = vrot.slane %v698, %v702
  %v705 = vadd.f32 %v634, %v703
  %v706 = vadd.f32 %v635, %v703
  %v707 = vadd.f32 %v636, %v703
  %v708 = vadd.f32 %v637, %v703
  %v709 = vadd.f32 %v638, %v703
  %v710 = vadd.f32 %v639, %v703
  %v711 = vadd.f32 %v640, %v703
  %v712 = vadd.f32 %v641, %v703
  %v713 = vadd.f32 %v642, %v703
  %v714 = vadd.f32 %v643, %v703
  %v715 = vadd.f32 %v644, %v703
  %v716 = vadd.f32 %v645, %v703
  %v717 = vadd.f32 %v646, %v703
  %v718 = vadd.f32 %v647, %v703
  %v719 = vadd.f32 %v648, %v703
  %v720 = vadd.f32 %v649, %v703
  %v721 = vadd.f32 %v650, %v703
  %v722 = vadd.f32 %v651, %v703
  %v723 = vadd.f32 %v652, %v703
  %v724 = vadd.f32 %v653, %v703
  %v725 = vadd.f32 %v654, %v703
  %v726 = vadd.f32 %v655, %v703
  %v727 = vadd.f32 %v656, %v703
  %v728 = vadd.f32 %v657, %v703
  %v729 = vadd.f32 %v658, %v703
  %v730 = vadd.f32 %v659, %v703
  %v731 = vadd.f32 %v660, %v703
  %v732 = vadd.f32 %v661, %v703
  %v733 = vadd.f32 %v662, %v703
  %v734 = vadd.f32 %v663, %v703
  %v735 = vadd.f32 %v664, %v703
  %v736 = vadd.f32 %v665, %v703
  %v737 = vadd.f32 %v666, %v703
  %v738 = vadd.f32 %v667, %v703
  %v739 = vadd.f32 %v668, %v703
  %v740 = vadd.f32 %v669, %v703
  %v741 = vadd.f32 %v670, %v703
  %v742 = vadd.f32 %v671, %v703
  %v743 = vadd.f32 %v672, %v703
  %v744 = vadd.f32 %v673, %v703
  %v745 = vadd.f32 %v674, %v703
  %v746 = vadd.f32 %v675, %v703
  %v747 = vadd.f32 %v676, %v703
  %v748 = vadd.f32 %v677, %v703
  %v749 = vadd.f32 %v678, %v703
  %v750 = vadd.f32 %v679, %v703
  %v751 = vadd.f32 %v680, %v703
  %v752 = vadd.f32 %v681, %v703
  %v753 = vadd.f32 %v682, %v703
  %v754 = vadd.f32 %v683, %v703
  %v755 = vadd.f32 %v684, %v703
  %v756 = vadd.f32 %v685, %v703
  %v757 = vadd.f32 %v686, %v703
  %v758 = vadd.f32 %v687, %v703
  %v759 = vadd.f32 %v688, %v703
  %v760 = vadd.f32 %v689, %v703
  %v761 = vadd.f32 %v690, %v703
  %v762 = vadd.f32 %v691, %v703
  %v763 = vadd.f32 %v692, %v703
  %v764 = vadd.f32 %v693, %v703
  %v765 = vadd.f32 %v694, %v703
  %v766 = vadd.f32 %v695, %v703
  %v767 = vadd.f32 %v696, %v703
  %v768 = vadd.f32 %v697, %v703
  %v769 = vmax.f32 %v705, 0.0
  %v770 = vmax.f32 %v706, 0.0
  %v771 = vmax.f32 %v707, 0.0
  %v772 = vmax.f32 %v708, 0.0
  %v773 = vmax.f32 %v709, 0.0
  %v774 = vmax.f32 %v710, 0.0
  %v775 = vmax.f32 %v711, 0.0
  %v776 = vmax.f32 %v712, 0.0
  %v777 = vmax.f32 %v713, 0.0
  %v778 = vmax.f32 %v714, 0.0
  %v779 = vmax.f32 %v715, 0.0
  %v780 = vmax.f32 %v716, 0.0
  %v781 = vmax.f32 %v717, 0.0
  %v782 = vmax.f32 %v718, 0.0
  %v783 = vmax.f32 %v719, 0.0
  %v784 = vmax.f32 %v720, 0.0
  %v785 = vmax.f32 %v721, 0.0
  %v786 = vmax.f32 %v722, 0.0
  %v787 = vmax.f32 %v723, 0.0
  %v788 = vmax.f32 %v724, 0.0
  %v789 = vmax.f32 %v725, 0.0
  %v790 = vmax.f32 %v726, 0.0
  %v791 = vmax.f32 %v727, 0.0
  %v792 = vmax.f32 %v728, 0.0
  %v793 = vmax.f32 %v729, 0.0
  %v794 = vmax.f32 %v730, 0.0
  %v795 = vmax.f32 %v731, 0.0
  %v796 = vmax.f32 %v732, 0.0
  %v797 = vmax.f32 %v733, 0.0
  %v798 = vmax.f32 %v734, 0.0
  %v799 = vmax.f32 %v735, 0.0
  %v800 = vmax.f32 %v736, 0.0
  %v801 = vmax.f32 %v737, 0.0
  %v802 = vmax.f32 %v738, 0.0
  %v803 = vmax.f32 %v739, 0.0
  %v804 = vmax.f32 %v740, 0.0
  %v805 = vmax.f32 %v741, 0.0
  %v806 = vmax.f32 %v742, 0.0
  %v807 = vmax.f32 %v743, 0.0
  %v808 = vmax.f32 %v744, 0.0
  %v809 = vmax.f32 %v745, 0.0
  %v810 = vmax.f32 %v746, 0.0
  %v811 = vmax.f32 %v747, 0.0
  %v812 = vmax.f32 %v748, 0.0
  %v813 = vmax.f32 %v749, 0.0
  %v814 = vmax.f32 %v750, 0.0
  %v815 = vmax.f32 %v751, 0.0
  %v816 = vmax.f32 %v752, 0.0
  %v817 = vmax.f32 %v753, 0.0
  %v818 = vmax.f32 %v754, 0.0
  %v819 = vmax.f32 %v755, 0.0
  %v820 = vmax.f32 %v756, 0.0
  %v821 = vmax.f32 %v757, 0.0
  %v822 = vmax.f32 %v758, 0.0
  %v823 = vmax.f32 %v759, 0.0
  %v824 = vmax.f32 %v760, 0.0
  %v825 = vmax.f32 %v761, 0.0
  %v826 = vmax.f32 %v762, 0.0
  %v827 = vmax.f32 %v763, 0.0
  %v828 = vmax.f32 %v764, 0.0
  %v829 = vmax.f32 %v765, 0.0
  %v830 = vmax.f32 %v766, 0.0
  %v831 = vmax.f32 %v767, 0.0
  %v832 = vmax.f32 %v768, 0.0
  %833 = vst [vmem:[%s4] sm:$0xff] %v769
  %834 = vst [vmem:[%s4 + $0x8] sm:$0xff] %v770
  %835 = vst [vmem:[%s4 + $0x10] sm:$0xff] %v771
  %836 = vst [vmem:[%s4 + $0x18] sm:$0xff] %v772
  %837 = vst [vmem:[%s4 + $0x20] sm:$0xff] %v773
  %838 = vst [vmem:[%s4 + $0x28] sm:$0xff] %v774
  %839 = vst [vmem:[%s4 + $0x30] sm:$0xff] %v775
  %840 = vst [vmem:[%s4 + $0x38] sm:$0xff] %v776
  %841 = vst [vmem:[%s4 + $0x40] sm:$0xff] %v777
  %842 = vst [vmem:[%s4 + $0x48] sm:$0xff] %v778
  %843 = vst [vmem:[%s4 + $0x50] sm:$0xff] %v779
  %844 = vst [vmem:[%s4 + $0x58] sm:$0xff] %v780
  %845 = vst [vmem:[%s4 + $0x60] sm:$0xff] %v781
  %846 = vst [vmem:[%s4 + $0x68] sm:$0xff] %v782
  %847 = vst [vmem:[%s4 + $0x70] sm:$0xff] %v783
  %848 = vst [vmem:[%s4 + $0x78] sm:$0xff] %v784
  %849 = vst [vmem:[%s4 + $0x80] sm:$0xff] %v785
  %850 = vst [vmem:[%s4 + $0x88] sm:$0xff] %v786
  %851 = vst [vmem:[%s4 + $0x90] sm:$0xff] %v787
  %852 = vst [vmem:[%s4 + $0x98] sm:$0xff] %v788
  %853 = vst [vmem:[%s4 + $0xa0] sm:$0xff] %v789
  %854 = vst [vmem:[%s4 + $0xa8] sm:$0xff] %v790
  %855 = vst [vmem:[%s4 + $0xb0] sm:$0xff] %v791
  %856 = vst [vmem:[%s4 + $0xb8] sm:$0xff] %v792
  %857 = vst [vmem:[%s4 + $0xc0] sm:$0xff] %v793
  %858 = vst [vmem:[%s4 + $0xc8] sm:$0xff] %v794
  %859 = vst [vmem:[%s4 + $0xd0] sm:$0xff] %v795
  %860 = vst [vmem:[%s4 + $0xd8] sm:$0xff] %v796
  %861 = vst [vmem:[%s4 + $0xe0] sm:$0xff] %v797
  %862 = vst [vmem:[%s4 + $0xe8] sm:$0xff] %v798
  %863 = vst [vmem:[%s4 + $0xf0] sm:$0xff] %v799
  %864 = vst [vmem:[%s4 + $0xf8] sm:$0xff] %v800
  %865 = vst [vmem:[%s4 + $0x100] sm:$0xff] %v801
  %866 = vst [vmem:[%s4 + $0x108] sm:$0xff] %v802
  %867 = vst [vmem:[%s4 + $0x110] sm:$0xff] %v803
  %868 = vst [vmem:[%s4 + $0x118] sm:$0xff] %v804
  %869 = vst [vmem:[%s4 + $0x120] sm:$0xff] %v805
  %870 = vst [vmem:[%s4 + $0x128] sm:$0xff] %v806
  %871 = vst [vmem:[%s4 + $0x130] sm:$0xff] %v807
  %872 = vst [vmem:[%s4 + $0x138] sm:$0xff] %v808
  %873 = vst [vmem:[%s4 + $0x140] sm:$0xff] %v809
  %874 = vst [vmem:[%s4 + $0x148] sm:$0xff] %v810
  %875 = vst [vmem:[%s4 + $0x150] sm:$0xff] %v811
  %876 = vst [vmem:[%s4 + $0x158] sm:$0xff] %v812
  %877 = vst [vmem:[%s4 + $0x160] sm:$0xff] %v813
  %878 = vst [vmem:[%s4 + $0x168] sm:$0xff] %v814
  %879 = vst [vmem:[%s4 + $0x170] sm:$0xff] %v815
  %880 = vst [vmem:[%s4 + $0x178] sm:$0xff] %v816
  %881 = vst [vmem:[%s4 + $0x180] sm:$0xff] %v817
  %882 = vst [vmem:[%s4 + $0x188] sm:$0xff] %v818
  %883 = vst [vmem:[%s4 + $0x190] sm:$0xff] %v819
  %884 = vst [vmem:[%s4 + $0x198] sm:$0xff] %v820
  %885 = vst [vmem:[%s4 + $0x1a0] sm:$0xff] %v821
  %886 = vst [vmem:[%s4 + $0x1a8] sm:$0xff] %v822
  %887 = vst [vmem:[%s4 + $0x1b0] sm:$0xff] %v823
  %888 = vst [vmem:[%s4 + $0x1b8] sm:$0xff] %v824
  %889 = vst [vmem:[%s4 + $0x1c0] sm:$0xff] %v825
  %890 = vst [vmem:[%s4 + $0x1c8] sm:$0xff] %v826
  %891 = vst [vmem:[%s4 + $0x1d0] sm:$0xff] %v827
  %892 = vst [vmem:[%s4 + $0x1d8] sm:$0xff] %v828
  %893 = vst [vmem:[%s4 + $0x1e0] sm:$0xff] %v829
  %894 = vst [vmem:[%s4 + $0x1e8] sm:$0xff] %v830
  %895 = vst [vmem:[%s4 + $0x1f0] sm:$0xff] %v831
  %896 = vst [vmem:[%s4 + $0x1f8] sm:$0xff] %v832
  // Predicated region
  $region18: #{conv_forward.1} parent=0 // pred_check
    _
  $region19: #{conv_forward.1} parent=0 // pred_check_branch
    %898 = sbr.rel (0) target = $region21
  $region20: #{conv_forward.1} parent=0 // pred_region
    _
  $region21: #{conv_forward.1} parent=0 // pred_fallthru
    _
  // Predicated region
  $region22: #{conv_forward.1} parent=0 // pred_check
    _
  $region23: #{conv_forward.1} parent=0 // pred_check_branch
    %900 = sbr.rel (0) target = $region25
  $region24: #{conv_forward.1} parent=0 // pred_region
    _
  $region25: #{conv_forward.1} parent=0 // pred_fallthru
    _

</llo_original>
